<compile_context>
chip_gen: v7x
topology: tpu7x:2x2x1
jax: 0.10.0
libtpu: 0.0.40
codegen_flags: <defaults>
</compile_context>

<pallas_src>
import jax
import jax.numpy as jnp
from jax.experimental import pallas as pl
from jax.experimental.pallas import tpu as pltpu


def _round_up(x, m):
    return ((x + m - 1) // m) * m


def _vmem_limit_bytes():
    """Generation-aware VMEM budget: ~75% of physical capacity (48 MiB v7x, 96 MiB v5e/v6e)."""
    try:
        cap = int(pltpu.get_tpu_info().vmem_capacity_bytes)
    except Exception:  # interpret mode / older jax: conservative fallback
        cap = 64 * 1024 * 1024
    return max(16 * 1024 * 1024, (cap * 3) // 4)


def message_sender_kernel(x_ref, w1_ref, b1_ref, w2_ref, b2_ref, out_ref):
    # log1p always in f32 on the VPU; x arrives untouched from HBM.
    log_x = jnp.log1p(x_ref[...].astype(jnp.float32))

    # Layer 1 (fused mu|logstd): one wide MXU matmul, N = 2*hidden.
    h = jnp.dot(log_x.astype(w1_ref.dtype), w1_ref[...],
                preferred_element_type=jnp.float32)
    h = jnp.maximum(h + b1_ref[...], 0.0)          # f32 bias + ReLU

    # Layer 2 (block-diagonal fused weight): one matmul, lane-dense N = 2*latent.
    y = jnp.dot(h.astype(w2_ref.dtype), w2_ref[...],
                preferred_element_type=jnp.float32)
    out_ref[...] = (y + b2_ref[...]).astype(out_ref.dtype)


def _fuse_params(p, compute_dtype):
    """Build fused wide weights once per call (cheap, outside the kernel)."""
    hidden = p["w1_mu"].shape[1]
    latent = p["w2_mu"].shape[1]
    w1 = jnp.concatenate([p["w1_mu"], p["w1_ls"]], axis=1).astype(compute_dtype)
    b1 = jnp.concatenate([p["b1_mu"], p["b1_ls"]], axis=1).astype(jnp.float32)
    zeros = jnp.zeros((hidden, latent), p["w2_mu"].dtype)
    w2 = jnp.concatenate(
        [jnp.concatenate([p["w2_mu"], zeros], axis=1),
         jnp.concatenate([zeros, p["w2_ls"]], axis=1)], axis=0).astype(compute_dtype)
    b2 = jnp.concatenate([p["b2_mu"], p["b2_ls"]], axis=1).astype(jnp.float32)
    return w1, b1, w2, b2


def _choose_tile_b(B, input_dim, hidden2, latent2, x_bytes, w_bytes, out_bytes,
                   vmem_budget):
    """Largest multiple-of-8 batch tile fitting VMEM, capped for megacore split."""
    # VMEM lane dim pads to 128 (sublane to 8) — honest accounting for narrow dims.
    in_l, h2_l, l2_l = (_round_up(d, 128) for d in (input_dim, hidden2, latent2))
    # Weights/biases: block index never changes (DMA'd once) but the pipeline
    # still allocates 2 buffers each.
    weight_bytes = 2 * ((in_l * h2_l + h2_l * l2_l) * w_bytes
                        + 8 * (h2_l + l2_l) * 4)
    budget = vmem_budget - weight_bytes - (1 << 20)     # 1 MiB slack
    per_row = (2 * in_l * x_bytes                       # double-buffered x tile
               + 2 * l2_l * out_bytes                   # double-buffered out tile
               + (in_l + h2_l + l2_l) * 4)              # f32 intermediates
    max_rows = max(8, (budget // per_row) // 8 * 8)
    # >= 2 grid steps whenever B > 8 so ("parallel",) shards across v7x's 2 TCs;
    # cap at 1024 rows (HBM-roofline sweet spot for the pipeline).
    target = _round_up(-(-B // 2), 8) if B > 8 else _round_up(B, 8)
    return int(max(8, min(target, max_rows, 1024)))


def message_sender_forward(x, params, *, tile_b=None, compute_dtype=jnp.float32,
                           out_dtype=jnp.float32, return_fused=False):
    """x: (B, input_dim) float32. params: per-branch weights stored (in, out).

    Returns (mu, logstd), each (B, latent), or the fused (B, 2*latent) slab if
    return_fused=True.  compute_dtype=bf16 halves weight traffic / MXU operand
    width (recommended on v5e too); out_dtype=bf16 halves output HBM traffic.
    """
    B, input_dim = x.shape
    hidden = params["w1_mu"].shape[1]
    latent = params["w2_mu"].shape[1]
    hidden2, latent2 = 2 * hidden, 2 * latent

    w1, b1, w2, b2 = _fuse_params(params, compute_dtype)

    vmem_limit = _vmem_limit_bytes()
    if tile_b is None:
        tile_b = _choose_tile_b(B, input_dim, hidden2, latent2,
                                jnp.dtype(x.dtype).itemsize,
                                jnp.dtype(compute_dtype).itemsize,
                                jnp.dtype(out_dtype).itemsize,
                                vmem_limit)
    tile_b = max(8, _round_up(int(tile_b), 8))

    # Ragged batch: no jnp.pad copy; the final partial block is masked on store.
    grid = pl.cdiv(B, tile_b)

    full = lambda shape: pl.BlockSpec(shape, lambda i: tuple(0 for _ in shape))

    grid_spec = pltpu.PrefetchScalarGridSpec(
        num_scalar_prefetch=0,
        grid=(grid,),
        in_specs=[
            pl.BlockSpec((tile_b, input_dim), lambda i: (i, 0)),  # x (f32, uncast)
            full((input_dim, hidden2)),                           # fused W1
            full((1, hidden2)),                                   # fused b1
            full((hidden2, latent2)),                             # block-diag W2
            full((1, latent2)),                                   # fused b2
        ],
        # Single lane-dense output block (tile_b, 2*latent) -> unmasked stores
        # everywhere except (possibly) the final partial batch block.
        out_specs=pl.BlockSpec((tile_b, latent2), lambda i: (i, 0)),
    )

    out = pl.pallas_call(
        message_sender_kernel,
        out_shape=jax.ShapeDtypeStruct((B, latent2), out_dtype),
        grid_spec=grid_spec,
        compiler_params=pltpu.CompilerParams(
            dimension_semantics=("parallel",),   # shards batch across v7x's 2 TCs
            vmem_limit_bytes=vmem_limit),
    )(x, w1, b1, w2, b2)

    if return_fused:
        return out
    # These slices are expected to fuse into downstream consumers; pass
    # return_fused=True if profiling shows them materializing.
    return out[:, :latent], out[:, latent:]


def init_params(key, input_dim, hidden_dim, latent_dim):
    """Deterministic synthetic init (uniform, PyTorch Linear default scale)."""
    ks = jax.random.split(key, 8)

    def lin(kw, kb, fan_in, fan_out):
        bound = 1.0 / jnp.sqrt(fan_in)
        w = jax.random.uniform(kw, (fan_in, fan_out), jnp.float32, -bound, bound)
        b = jax.random.uniform(kb, (1, fan_out), jnp.float32, -bound, bound)
        return w, b

    w1m, b1m = lin(ks[0], ks[1], input_dim, hidden_dim)
    w2m, b2m = lin(ks[2], ks[3], hidden_dim, latent_dim)
    w1s, b1s = lin(ks[4], ks[5], input_dim, hidden_dim)
    w2s, b2s = lin(ks[6], ks[7], hidden_dim, latent_dim)
    return dict(w1_mu=w1m, b1_mu=b1m, w2_mu=w2m, b2_mu=b2m,
                w1_ls=w1s, b1_ls=b1s, w2_ls=w2s, b2_ls=b2s)


def reference_forward(x, p):
    log_x = jnp.log1p(x)
    h_mu = jax.nn.relu(log_x @ p["w1_mu"] + p["b1_mu"])
    mu = h_mu @ p["w2_mu"] + p["b2_mu"]
    h_s = jax.nn.relu(log_x @ p["w1_ls"] + p["b1_ls"])
    ls = h_s @ p["w2_ls"] + p["b2_ls"]
    return mu, ls


if __name__ == "__main__":
    # Module defaults for hidden/latent; small batch/input for the demo.
    B, INPUT_DIM, HIDDEN_DIM, LATENT_DIM = 8, 32, 128, 64

    key = jax.random.PRNGKey(0)
    k_x, k_x2, k_x3, k_p = jax.random.split(key, 4)

    # Non-negative counts-like input (log1p implies counts), float32.
    x = jax.random.uniform(k_x, (B, INPUT_DIM), jnp.float32, 0.0, 5.0)
    params = init_params(k_p, INPUT_DIM, HIDDEN_DIM, LATENT_DIM)
    mu_ref, ls_ref = reference_forward(x, params)

    # 1) f32 path — exact (strict tolerance) vs. the pure-JAX reference.
    mu, logstd = message_sender_forward(x, params)
    jax.block_until_ready((mu, logstd))
    assert mu.shape == (B, LATENT_DIM) and logstd.shape == (B, LATENT_DIM)
    assert jnp.allclose(mu, mu_ref, atol=1e-5, rtol=1e-5)
    assert jnp.allclose(logstd, ls_ref, atol=1e-5, rtol=1e-5)

    # 2) Ragged batch (B=13, not a multiple of 8) — exercises the cdiv-grid
    #    partial-block path (no jnp.pad copy) and a 2-step parallel grid.
    x2 = jax.random.uniform(k_x2, (13, INPUT_DIM), jnp.float32, 0.0, 5.0)
    mu2, ls2 = message_sender_forward(x2, params)
    jax.block_until_ready((mu2, ls2))
    mu2_ref, ls2_ref = reference_forward(x2, params)
    assert mu2.shape == (13, LATENT_DIM)
    assert jnp.allclose(mu2, mu2_ref, atol=1e-5, rtol=1e-5)
    assert jnp.allclose(ls2, ls2_ref, atol=1e-5, rtol=1e-5)

    # 3) Mid-size batch — tile chooser splits it into >= 2 parallel steps (megacore).
    x3 = jax.random.uniform(k_x3, (40, INPUT_DIM), jnp.float32, 0.0, 5.0)
    mu3, ls3 = message_sender_forward(x3, params)
    jax.block_until_ready((mu3, ls3))
    mu3_ref, ls3_ref = reference_forward(x3, params)
    assert jnp.allclose(mu3, mu3_ref, atol=1e-5, rtol=1e-5)
    assert jnp.allclose(ls3, ls3_ref, atol=1e-5, rtol=1e-5)

    # 4) bf16 MXU-operand path (all generations); f32 x/log1p/accumulate kept.
    mu_bf, ls_bf = message_sender_forward(x, params, compute_dtype=jnp.bfloat16)
    jax.block_until_ready((mu_bf, ls_bf))
    assert jnp.allclose(mu_bf, mu_ref, atol=5e-2, rtol=5e-2)
    assert jnp.allclose(ls_bf, ls_ref, atol=5e-2, rtol=5e-2)

    # 5) bf16 output path (halves output HBM traffic); fused slab return.
    fused = message_sender_forward(x, params, compute_dtype=jnp.bfloat16,
                                   out_dtype=jnp.bfloat16, return_fused=True)
    jax.block_until_ready(fused)
    assert fused.shape == (B, 2 * LATENT_DIM) and fused.dtype == jnp.bfloat16
    mu_b = fused[:, :LATENT_DIM].astype(jnp.float32)
    ls_b = fused[:, LATENT_DIM:].astype(jnp.float32)
    assert jnp.allclose(mu_b, mu_ref, atol=1e-1, rtol=5e-2)
    assert jnp.allclose(ls_b, ls_ref, atol=1e-1, rtol=5e-2)

    print("KERNEL_OK")
</pallas_src>

<mosaic_0001>
module attributes {stable_mosaic.version = 11 : i64} {
  func.func @message_sender_kernel(%arg0: i32, %arg1: memref<8x32xf32, #tpu.memory_space<vmem>>, %arg2: memref<32x256xf32, #tpu.memory_space<vmem>>, %arg3: memref<1x256xf32, #tpu.memory_space<vmem>>, %arg4: memref<256x128xf32, #tpu.memory_space<vmem>>, %arg5: memref<1x128xf32, #tpu.memory_space<vmem>>, %arg6: memref<8x128xf32, #tpu.memory_space<vmem>>) attributes {dimension_semantics = [#tpu.dimension_semantics<parallel>], iteration_bounds = array<i64: 1>, scalar_prefetch = 0 : i64, scratch_operands = 0 : i64, tpu.core_type = #tpu.core_type<tc>, window_params = [{transform_indices = @transform_0, window_bounds = array<i64: 8, 32>}, {pipeline_mode = #tpu.pipeline_mode<synchronous>, transform_indices = @transform_1, window_bounds = array<i64: 32, 256>}, {pipeline_mode = #tpu.pipeline_mode<synchronous>, transform_indices = @transform_2, window_bounds = array<i64: 1, 256>}, {pipeline_mode = #tpu.pipeline_mode<synchronous>, transform_indices = @transform_3, window_bounds = array<i64: 256, 128>}, {pipeline_mode = #tpu.pipeline_mode<synchronous>, transform_indices = @transform_4, window_bounds = array<i64: 1, 128>}, {transform_indices = @transform_5, window_bounds = array<i64: 8, 128>}]} {
    %c0 = arith.constant 0 : index
    %c0_0 = arith.constant 0 : index
    %0 = vector.load %arg1[%c0, %c0_0] : memref<8x32xf32, #tpu.memory_space<vmem>>, vector<8x32xf32>
    %1 = math.log1p %0 : vector<8x32xf32>
    %c0_1 = arith.constant 0 : index
    %c0_2 = arith.constant 0 : index
    %2 = vector.load %arg2[%c0_1, %c0_2] : memref<32x256xf32, #tpu.memory_space<vmem>>, vector<32x256xf32>
    %cst = arith.constant dense<0.000000e+00> : vector<8x256xf32>
    %3 = tpu.matmul %1, %2, %cst {dimension_numbers = #tpu.dot_dimension_numbers<[1], [0], [0], [1], [0, 0, 1, 1], [], []>} : vector<8x32xf32>, vector<32x256xf32>, vector<8x256xf32> -> vector<8x256xf32>
    %c0_3 = arith.constant 0 : index
    %c0_4 = arith.constant 0 : index
    %4 = vector.load %arg3[%c0_3, %c0_4] : memref<1x256xf32, #tpu.memory_space<vmem>>, vector<1x256xf32>
    %5 = vector.broadcast %4 : vector<1x256xf32> to vector<8x256xf32>
    %6 = arith.addf %3, %5 : vector<8x256xf32>
    %cst_5 = arith.constant 0.000000e+00 : f32
    %7 = vector.broadcast %cst_5 : f32 to vector<8x256xf32>
    %8 = arith.maximumf %6, %7 : vector<8x256xf32>
    %c0_6 = arith.constant 0 : index
    %c0_7 = arith.constant 0 : index
    %9 = vector.load %arg4[%c0_6, %c0_7] : memref<256x128xf32, #tpu.memory_space<vmem>>, vector<256x128xf32>
    %cst_8 = arith.constant dense<0.000000e+00> : vector<8x128xf32>
    %10 = tpu.matmul %8, %9, %cst_8 {dimension_numbers = #tpu.dot_dimension_numbers<[1], [0], [0], [1], [0, 0, 1, 1], [], []>} : vector<8x256xf32>, vector<256x128xf32>, vector<8x128xf32> -> vector<8x128xf32>
    %c0_9 = arith.constant 0 : index
    %c0_10 = arith.constant 0 : index
    %11 = vector.load %arg5[%c0_9, %c0_10] : memref<1x128xf32, #tpu.memory_space<vmem>>, vector<1x128xf32>
    %12 = vector.broadcast %11 : vector<1x128xf32> to vector<8x128xf32>
    %13 = arith.addf %10, %12 : vector<8x128xf32>
    %c0_11 = arith.constant 0 : index
    %c0_12 = arith.constant 0 : index
    %14 = vector.load %arg6[%c0_11, %c0_12] : memref<8x128xf32, #tpu.memory_space<vmem>>, vector<8x128xf32>
    tpu.vector_store %arg6[%c0_11, %c0_12], %13 {strides = array<i32>} : memref<8x128xf32, #tpu.memory_space<vmem>>, vector<8x128xf32>,
    return
  }
  func.func @transform_0(%arg0: i32) -> (i32, i32) {
    %c0_i32 = arith.constant 0 : i32
    %c0_i32_0 = arith.constant 0 : i32
    return %arg0, %c0_i32 : i32, i32
  }
  func.func @transform_1(%arg0: i32) -> (i32, i32) {
    %c0_i32 = arith.constant 0 : i32
    %c0_i32_0 = arith.constant 0 : i32
    %c0_i32_1 = arith.constant 0 : i32
    return %c0_i32, %c0_i32_0 : i32, i32
  }
  func.func @transform_2(%arg0: i32) -> (i32, i32) {
    %c0_i32 = arith.constant 0 : i32
    %c0_i32_0 = arith.constant 0 : i32
    %c0_i32_1 = arith.constant 0 : i32
    return %c0_i32, %c0_i32_0 : i32, i32
  }
  func.func @transform_3(%arg0: i32) -> (i32, i32) {
    %c0_i32 = arith.constant 0 : i32
    %c0_i32_0 = arith.constant 0 : i32
    %c0_i32_1 = arith.constant 0 : i32
    return %c0_i32, %c0_i32_0 : i32, i32
  }
  func.func @transform_4(%arg0: i32) -> (i32, i32) {
    %c0_i32 = arith.constant 0 : i32
    %c0_i32_0 = arith.constant 0 : i32
    %c0_i32_1 = arith.constant 0 : i32
    return %c0_i32, %c0_i32_0 : i32, i32
  }
  func.func @transform_5(%arg0: i32) -> (i32, i32) {
    %c0_i32 = arith.constant 0 : i32
    %c0_i32_0 = arith.constant 0 : i32
    return %arg0, %c0_i32 : i32, i32
  }
}

</mosaic_0001>

<llo_original>
// kernel: tpu_custom_call.1
$region0: #{tpu_custom_call.1}
  #allocation0 [shape = 'u32[]', space=smem, size = 0x4, offset = 0x4, fixed_abs, tag = 'smem constant byte address 0x4 - core index']
  #allocation1 [shape = 'u32[144,128]{1,0:T(1,128)}', space=vmem, size = 0x12000, scoped, tag = 'internal scratch']
  %s0 = inlined_call_operand.hbm [shape: f32[8,32], index: 0, kind: input, shape index: {}]
  %s1 = inlined_call_operand.hbm [shape: f32[32,256], index: 1, kind: input, shape index: {}]
  %s2 = inlined_call_operand.vmem [shape: f32[1,256], index: 2, kind: input, shape index: {}]
  %s3 = inlined_call_operand.hbm [shape: f32[256,128], index: 3, kind: input, shape index: {}]
  %s4 = inlined_call_operand.vmem [shape: f32[1,128], index: 4, kind: input, shape index: {}]
  %s5 = inlined_call_operand.hbm [shape: f32[8,128], index: 5, kind: output, shape index: {}]
  %s6 = sld [smem:[#allocation0]]
  $region42: #{tpu_custom_call.1} parent=0
    _
  %s8 = ssub.s32 1, %s6
  %s9 = scalar_select 0, %s8, %s6
  $region1: #{tpu_custom_call.1} parent=0
    #allocation2 [shape = 'u8[4096]{0}', space=vmem, size = 0x1000, scoped, tag = 'input window, operand 0, single buffered']
    #allocation3 [shape = 's32[1]{0}', space=sflag, size = 0x4, scoped, tag = 'scoped memory for tpu_custom_call.1']
    #allocation4 [shape = 's32[1]{0}', space=sflag, size = 0x4, scoped, tag = 'scoped memory for tpu_custom_call.1']
    #allocation5 [shape = 'u8[32768]{0}', space=vmem, size = 0x8000, scoped, tag = 'input window, operand 1, single buffered']
    #allocation6 [shape = 's32[1]{0}', space=sflag, size = 0x4, scoped, tag = 'scoped memory for tpu_custom_call.1']
    #allocation7 [shape = 'u8[131072]{0}', space=vmem, size = 0x20000, scoped, tag = 'input window, operand 3, single buffered']
    #allocation8 [shape = 'u8[4096]{0}', space=vmem, size = 0x1000, scoped, tag = 'output window, operand 0, single buffered']
    %10 = vsyncpa [#allocation3], 0
    %11 = vsyncpa [#allocation6], 0
    %12 = vsyncpa [#allocation4], 0
    // Predicated region
    $region2: #{tpu_custom_call.1} parent=1 // pred_check
      _
    $region3: #{tpu_custom_call.1} parent=1 // pred_check_branch
      %14 = sbr.rel (0) target = $region5
    $region4: #{tpu_custom_call.1} parent=1 // pred_region
      %s16 = ssub.s32 128, 128
      %17 = vsyncadd [#allocation3], %s16
      %s19 = sshll.u32 [#allocation2], 4
      %s20 = int_to_ptr.vmem [resolvable:$true] %s19
      %22 = dma.hbm_to_vmem [thread:$0]  %s0, 128, %s20, [#allocation3]
    $region5: #{tpu_custom_call.1} parent=1 // pred_fallthru
      _
    // Predicated region
    $region6: #{tpu_custom_call.1} parent=1 // pred_check
      _
    $region7: #{tpu_custom_call.1} parent=1 // pred_check_branch
      %24 = sbr.rel (0) target = $region9
    $region8: #{tpu_custom_call.1} parent=1 // pred_region
      %s26 = ssub.s32 1024, 1024
      %27 = vsyncadd [#allocation6], %s26
      %s28 = sshll.u32 [#allocation5], 4
      %s29 = int_to_ptr.vmem [resolvable:$true] %s28
      %34 = dma.hbm_to_vmem [thread:$0]  %s1, 1024, %s29, [#allocation6], 256, 256, 16
    $region9: #{tpu_custom_call.1} parent=1 // pred_fallthru
      _
    // Predicated region
    $region10: #{tpu_custom_call.1} parent=1 // pred_check
      _
    $region11: #{tpu_custom_call.1} parent=1 // pred_check_branch
      %36 = sbr.rel (0) target = $region13
    $region12: #{tpu_custom_call.1} parent=1 // pred_region
      _
    $region13: #{tpu_custom_call.1} parent=1 // pred_fallthru
      _
    // Predicated region
    $region14: #{tpu_custom_call.1} parent=1 // pred_check
      _
    $region15: #{tpu_custom_call.1} parent=1 // pred_check_branch
      %38 = sbr.rel (0) target = $region17
    $region16: #{tpu_custom_call.1} parent=1 // pred_region
      %s40 = ssub.s32 4096, 4096
      %41 = vsyncadd [#allocation6], %s40
      %s42 = sshll.u32 [#allocation7], 4
      %s43 = int_to_ptr.vmem [resolvable:$true] %s42
      %48 = dma.hbm_to_vmem [thread:$0]  %s3, 4096, %s43, [#allocation6], 128, 128, 8
    $region17: #{tpu_custom_call.1} parent=1 // pred_fallthru
      _
    // Predicated region
    $region18: #{tpu_custom_call.1} parent=1 // pred_check
      _
    $region19: #{tpu_custom_call.1} parent=1 // pred_check_branch
      %50 = sbr.rel (0) target = $region21
    $region20: #{tpu_custom_call.1} parent=1 // pred_region
      _
    $region21: #{tpu_custom_call.1} parent=1 // pred_fallthru
      _
    // Predicated region
    $region22: #{tpu_custom_call.1} parent=1 // pred_check
      _
    $region23: #{tpu_custom_call.1} parent=1 // pred_check_branch
      %52 = sbr.rel (0) target = $region25
    $region24: #{tpu_custom_call.1} parent=1 // pred_region
      %53 = dma.done [#allocation3], 128
    $region25: #{tpu_custom_call.1} parent=1 // pred_fallthru
      _
    // Predicated region
    $region26: #{tpu_custom_call.1} parent=1 // pred_check
      _
    $region27: #{tpu_custom_call.1} parent=1 // pred_check_branch
      %55 = sbr.rel (0) target = $region29
    $region28: #{tpu_custom_call.1} parent=1 // pred_region
      %56 = dma.done [#allocation6], 1024
    $region29: #{tpu_custom_call.1} parent=1 // pred_fallthru
      _
    // Predicated region
    $region30: #{tpu_custom_call.1} parent=1 // pred_check
      _
    $region31: #{tpu_custom_call.1} parent=1 // pred_check_branch
      %58 = sbr.rel (0) target = $region33
    $region32: #{tpu_custom_call.1} parent=1 // pred_region
      %59 = dma.done [#allocation6], 4096
    $region33: #{tpu_custom_call.1} parent=1 // pred_fallthru
      _
    %v60 = vld [vmem:[#allocation2] sm:$0xff]
    %v61 = vadd.f32 %v60, 1.0
    %v62 = vlog2.pop %v61
    %v63 = vmul.f32 %v62, 0.6931472
    %v64 = vmul.f32 -0.5, %v60
    %v65 = vadd.f32 %v64, 1.0
    %v66 = vmul.f32 %v65, %v60
    %v67 = vand.u32 2147483647, %v60
    %vm68 = vcmp.lt.f32.partialorder %v67, 0.0004427343
    %v69 = vsel %vm68, %v66, %v63
    %v70 = vld [vmem:[#allocation5] sm:$0xff]
    %v71 = vld [vmem:[#allocation5 + $0x8] sm:$0xff]
    %v72 = vld [vmem:[#allocation5 + $0x10] sm:$0xff]
    %v73 = vld [vmem:[#allocation5 + $0x18] sm:$0xff]
    %v74 = vld [vmem:[#allocation5 + $0x20] sm:$0xff]
    %v75 = vld [vmem:[#allocation5 + $0x28] sm:$0xff]
    %v76 = vld [vmem:[#allocation5 + $0x30] sm:$0xff]
    %v77 = vld [vmem:[#allocation5 + $0x38] sm:$0xff]
    %v78 = vld [vmem:[%s2] sm:$0x3]
    %v80 = vlaneseq
    %v81 = vshrl.u32 %v80, 7
    %v82 = vsub.s32 0, %v81
    %v83 = vrot.slane %v78, %v82
    %v84 = vlaneseq
    %v85 = vshrl.u32 %v84, 7
    %v86 = vsub.s32 1, %v85
    %v87 = vrot.slane %v78, %v86
    %vm90 = vcmask 261120
    %v92 = vsel %vm90, %v69, 0
    %94 = vmatprep.subr.mxu0 %v71
    %95 = vmatpush1.msra.mxu0 %v70
    %96 = vmatprep.subr.mxu0 %v73
    %97 = vmatpush1.msra.mxu0 %v72
    %98 = vmatprep.subr.mxu0 %v75
    %99 = vmatpush1.msra.mxu0 %v74
    %100 = vmatprep.subr.mxu0 %v77
    %101 = vmatpush1.msra.mxu0 %v76
    %102 = vmatprep.subr.mxu0 0.0
    %103 = vmatpush1.msra.mxu0 0.0
    %104 = vmatprep.subr.mxu0 0.0
    %105 = vmatpush1.msra.mxu0 0.0
    %106 = vmatprep.subr.mxu0 0.0
    %107 = vmatpush1.msra.mxu0 0.0
    %108 = vmatprep.subr.mxu0 0.0
    %109 = vmatpush1.msra.mxu0 0.0
    %110 = vmatprep.subr.mxu0 0.0
    %111 = vmatpush1.msra.mxu0 0.0
    %112 = vmatprep.subr.mxu0 0.0
    %113 = vmatpush1.msra.mxu0 0.0
    %114 = vmatprep.subr.mxu0 0.0
    %115 = vmatpush1.msra.mxu0 0.0
    %116 = vmatprep.subr.mxu0 0.0
    %117 = vmatpush1.msra.mxu0 0.0
    %118 = vmatprep.subr.mxu0 0.0
    %119 = vmatpush1.msra.mxu0 0.0
    %120 = vmatprep.subr.mxu0 0.0
    %121 = vmatpush1.msra.mxu0 0.0
    %122 = vmatprep.subr.mxu0 0.0
    %123 = vmatpush1.msra.mxu0 0.0
    %124 = vmatprep.subr.mxu0 0.0
    %125 = vmatpush1.msra.mxu0 0.0
    %126 = vmatprep.subr.mxu0 0.0
    %127 = vmatpush1.msra.mxu0 0.0
    %128 = vmatprep.subr.mxu0 0.0
    %129 = vmatpush1.msra.mxu0 0.0
    %130 = vmatprep.subr.mxu0 0.0
    %131 = vmatpush1.msra.mxu0 0.0
    %132 = vmatprep.subr.mxu0 0.0
    %133 = vmatpush1.msra.mxu0 0.0
    %134 = vmatprep.subr.mxu0 0.0
    %135 = vmatpush1.msra.mxu0 0.0
    %136 = vmatprep.subr.mxu0 0.0
    %137 = vmatpush1.msra.mxu0 0.0
    %138 = vmatprep.subr.mxu0 0.0
    %139 = vmatpush1.msra.mxu0 0.0
    %140 = vmatprep.subr.mxu0 0.0
    %141 = vmatpush1.msra.mxu0 0.0
    %142 = vmatprep.subr.mxu0 0.0
    %143 = vmatpush1.msra.mxu0 0.0
    %144 = vmatprep.subr.mxu0 0.0
    %145 = vmatpush1.msra.mxu0 0.0
    %146 = vmatprep.subr.mxu0 0.0
    %147 = vmatpush1.msra.mxu0 0.0
    %148 = vmatprep.subr.mxu0 0.0
    %149 = vmatpush1.msra.mxu0 0.0
    %150 = vmatprep.subr.mxu0 0.0
    %151 = vmatpush1.msra.mxu0 0.0
    %152 = vmatprep.subr.mxu0 0.0
    %153 = vmatpush1.msra.mxu0 0.0
    %154 = vmatprep.subr.mxu0 0.0
    %155 = vmatpush1.msra.mxu0 0.0
    %156 = vmatprep.subr.mxu0 0.0
    %157 = vmatpush1.msra.mxu0 0.0
    %158 = vmatprep.mubr.f32.mxu0 0.0
    %159 = vmatmul.mubr.f32.gmra.mrb[0].mxu0 %v92
    %v160 = vpop.f32.mrb[0].mxu0
    %v161 = vadd.f32 %v83, %v160
    %v162 = vpop.f32.mrb[0].mxu0
    %v163 = vadd.f32 %v87, %v162
    %164 = vdwg.mxu0
    %v165 = vmax.f32 %v161, 0.0
    %v166 = vmax.f32 %v163, 0.0
    %v167 = vld [vmem:[#allocation7] sm:$0xff]
    %v168 = vld [vmem:[#allocation7 + $0x8] sm:$0xff]
    %v169 = vld [vmem:[#allocation7 + $0x10] sm:$0xff]
    %v170 = vld [vmem:[#allocation7 + $0x18] sm:$0xff]
    %v171 = vld [vmem:[#allocation7 + $0x20] sm:$0xff]
    %v172 = vld [vmem:[#allocation7 + $0x28] sm:$0xff]
    %v173 = vld [vmem:[#allocation7 + $0x30] sm:$0xff]
    %v174 = vld [vmem:[#allocation7 + $0x38] sm:$0xff]
    %v175 = vld [vmem:[#allocation7 + $0x40] sm:$0xff]
    %v176 = vld [vmem:[#allocation7 + $0x48] sm:$0xff]
    %v177 = vld [vmem:[#allocation7 + $0x50] sm:$0xff]
    %v178 = vld [vmem:[#allocation7 + $0x58] sm:$0xff]
    %v179 = vld [vmem:[#allocation7 + $0x60] sm:$0xff]
    %v180 = vld [vmem:[#allocation7 + $0x68] sm:$0xff]
    %v181 = vld [vmem:[#allocation7 + $0x70] sm:$0xff]
    %v182 = vld [vmem:[#allocation7 + $0x78] sm:$0xff]
    %v183 = vld [vmem:[#allocation7 + $0x80] sm:$0xff]
    %v184 = vld [vmem:[#allocation7 + $0x88] sm:$0xff]
    %v185 = vld [vmem:[#allocation7 + $0x90] sm:$0xff]
    %v186 = vld [vmem:[#allocation7 + $0x98] sm:$0xff]
    %v187 = vld [vmem:[#allocation7 + $0xa0] sm:$0xff]
    %v188 = vld [vmem:[#allocation7 + $0xa8] sm:$0xff]
    %v189 = vld [vmem:[#allocation7 + $0xb0] sm:$0xff]
    %v190 = vld [vmem:[#allocation7 + $0xb8] sm:$0xff]
    %v191 = vld [vmem:[#allocation7 + $0xc0] sm:$0xff]
    %v192 = vld [vmem:[#allocation7 + $0xc8] sm:$0xff]
    %v193 = vld [vmem:[#allocation7 + $0xd0] sm:$0xff]
    %v194 = vld [vmem:[#allocation7 + $0xd8] sm:$0xff]
    %v195 = vld [vmem:[#allocation7 + $0xe0] sm:$0xff]
    %v196 = vld [vmem:[#allocation7 + $0xe8] sm:$0xff]
    %v197 = vld [vmem:[#allocation7 + $0xf0] sm:$0xff]
    %v198 = vld [vmem:[#allocation7 + $0xf8] sm:$0xff]
    %v199 = vld [vmem:[%s4] sm:$0x1]
    %v201 = vlaneseq
    %v202 = vshrl.u32 %v201, 7
    %v203 = vsub.s32 0, %v202
    %v204 = vrot.slane %v199, %v203
    %206 = vmatprep.subr.mxu0 0.0
    %207 = vmatpush1.msra.mxu0 %v167
    %208 = vmatprep.subr.mxu0 0.0
    %209 = vmatpush1.msra.mxu0 %v168
    %210 = vmatprep.subr.mxu0 0.0
    %211 = vmatpush1.msra.mxu0 %v169
    %212 = vmatprep.subr.mxu0 0.0
    %213 = vmatpush1.msra.mxu0 %v170
    %214 = vmatprep.subr.mxu0 0.0
    %215 = vmatpush1.msra.mxu0 %v171
    %216 = vmatprep.subr.mxu0 0.0
    %217 = vmatpush1.msra.mxu0 %v172
    %218 = vmatprep.subr.mxu0 0.0
    %219 = vmatpush1.msra.mxu0 %v173
    %220 = vmatprep.subr.mxu0 0.0
    %221 = vmatpush1.msra.mxu0 %v174
    %222 = vmatprep.subr.mxu0 0.0
    %223 = vmatpush1.msra.mxu0 %v175
    %224 = vmatprep.subr.mxu0 0.0
    %225 = vmatpush1.msra.mxu0 %v176
    %226 = vmatprep.subr.mxu0 0.0
    %227 = vmatpush1.msra.mxu0 %v177
    %228 = vmatprep.subr.mxu0 0.0
    %229 = vmatpush1.msra.mxu0 %v178
    %230 = vmatprep.subr.mxu0 0.0
    %231 = vmatpush1.msra.mxu0 %v179
    %232 = vmatprep.subr.mxu0 0.0
    %233 = vmatpush1.msra.mxu0 %v180
    %234 = vmatprep.subr.mxu0 0.0
    %235 = vmatpush1.msra.mxu0 %v181
    %236 = vmatprep.subr.mxu0 0.0
    %237 = vmatpush1.msra.mxu0 %v182
    %238 = vmatprep.subr.mxu0 0.0
    %239 = vmatpush1.msra.mxu0 %v183
    %240 = vmatprep.subr.mxu0 0.0
    %241 = vmatpush1.msra.mxu0 %v184
    %242 = vmatprep.subr.mxu0 0.0
    %243 = vmatpush1.msra.mxu0 %v185
    %244 = vmatprep.subr.mxu0 0.0
    %245 = vmatpush1.msra.mxu0 %v186
    %246 = vmatprep.subr.mxu0 0.0
    %247 = vmatpush1.msra.mxu0 %v187
    %248 = vmatprep.subr.mxu0 0.0
    %249 = vmatpush1.msra.mxu0 %v188
    %250 = vmatprep.subr.mxu0 0.0
    %251 = vmatpush1.msra.mxu0 %v189
    %252 = vmatprep.subr.mxu0 0.0
    %253 = vmatpush1.msra.mxu0 %v190
    %254 = vmatprep.subr.mxu0 0.0
    %255 = vmatpush1.msra.mxu0 %v191
    %256 = vmatprep.subr.mxu0 0.0
    %257 = vmatpush1.msra.mxu0 %v192
    %258 = vmatprep.subr.mxu0 0.0
    %259 = vmatpush1.msra.mxu0 %v193
    %260 = vmatprep.subr.mxu0 0.0
    %261 = vmatpush1.msra.mxu0 %v194
    %262 = vmatprep.subr.mxu0 0.0
    %263 = vmatpush1.msra.mxu0 %v195
    %264 = vmatprep.subr.mxu0 0.0
    %265 = vmatpush1.msra.mxu0 %v196
    %266 = vmatprep.subr.mxu0 0.0
    %267 = vmatpush1.msra.mxu0 %v197
    %268 = vmatprep.subr.mxu0 0.0
    %269 = vmatpush1.msra.mxu0 %v198
    %270 = vmatprep.mubr.f32.mxu0 %v166
    %271 = vmatmul.mubr.f32.gmra.mrb[0].mxu0 %v165
    %v272 = vpop.f32.mrb[0].mxu0
    %v273 = vadd.f32 %v204, %v272
    %v274 = vpop.f32.mrb[0].mxu0
    %275 = vdwg.mxu0
    %276 = vst [vmem:[#allocation8] sm:$0xff] %v273
    // Predicated region
    $region34: #{tpu_custom_call.1} parent=1 // pred_check
      _
    $region35: #{tpu_custom_call.1} parent=1 // pred_check_branch
      %278 = sbr.rel (0) target = $region37
    $region36: #{tpu_custom_call.1} parent=1 // pred_region
      %s280 = ssub.s32 128, 128
      %281 = vsyncadd [#allocation4], %s280
      %s283 = sshll.u32 [#allocation8], 4
      %s284 = int_to_ptr.vmem [resolvable:$true] %s283
      %286 = dma.vmem_to_hbm [thread:$0]  %s284, 128, %s5, [#allocation4]
    $region37: #{tpu_custom_call.1} parent=1 // pred_fallthru
      _
    // Predicated region
    $region38: #{tpu_custom_call.1} parent=1 // pred_check
      _
    $region39: #{tpu_custom_call.1} parent=1 // pred_check_branch
      %288 = sbr.rel (0) target = $region41
    $region40: #{tpu_custom_call.1} parent=1 // pred_region
      %289 = dma.done [#allocation4], 128
    $region41: #{tpu_custom_call.1} parent=1 // pred_fallthru
      _
    %290 = vsyncpa [#allocation3], 1
    %291 = vsyncpa [#allocation6], 1
    %292 = vsyncpa [#allocation4], 1

</llo_original>
